<compile_context>
chip_gen: v7x
topology: tpu7x:2x2x1
jax: 0.10.0
libtpu: 0.0.40
codegen_flags: <defaults>
</compile_context>

<pallas_src>
import functools

import jax
import jax.numpy as jnp
from jax.experimental import pallas as pl
from jax.experimental.pallas import tpu as pltpu

INPUT_DIM = 4
HIDDEN_DIM = 64
OUTPUT_DIM = 2


def _round_up(n, m):
    return ((n + m - 1) // m) * m


def _pinn_kernel(x_ref, w1_ref, b1_ref, w2_ref, b2_ref, w3_ref, b3_ref, o_ref,
                 *, rm, matmul_dtype):
    """3-layer MLP forward for one batch tile.

    x_ref  : (bm, 4)   f32           batch on sublanes, features on lanes
    w1_ref : (4, 64)   f32           (in, out) layout
    b1_ref : (1, 64)   f32
    w2_ref : (64, 64)  matmul_dtype  (in, out) layout
    b2_ref : (1, 64)   f32
    w3_ref : (2, 64)   matmul_dtype  (out, in) layout
    b3_ref : (2, 1)    f32
    o_ref  : (2, bm)   f32           lane-dense (transposed) output tile
    """
    bm = x_ref.shape[0]
    n_sub = bm // rm  # static

    def compute(x):
        # Layer 1 (K=4): four broadcast FMAs on the VPU, f32, bias folded into
        # the first multiply-add.
        acc = b1_ref[...] + x[:, 0:1] * w1_ref[0:1, :]
        for k in range(1, INPUT_DIM):
            acc = acc + x[:, k:k + 1] * w1_ref[k:k + 1, :]
        h1 = jnp.tanh(acc)                                        # (rows, 64) f32
        # Layer 2 (64x64) on the MXU, f32 accumulation.
        h2 = jnp.tanh(
            jnp.dot(h1.astype(matmul_dtype), w2_ref[...],
                    preferred_element_type=jnp.float32) + b2_ref[...])
        # Layer 3: contract the 64-dim of (2,64) x (rows,64) -> (2, rows) so
        # the output store is lane-dense (no in-kernel transpose needed).
        y_t = jax.lax.dot_general(
            w3_ref[...], h2.astype(matmul_dtype),
            dimension_numbers=(((1,), (1,)), ((), ())),
            preferred_element_type=jnp.float32) + b3_ref[...]
        return y_t                                                # (2, rows) f32

    if n_sub <= 1:
        o_ref[...] = compute(x_ref[...]).astype(o_ref.dtype)
    else:
        # Bound live ranges: rm-row sub-chunks keep activations in-vreg.
        def body(s, carry):
            r0 = pl.multiple_of(s * rm, rm)
            y_t = compute(x_ref[pl.ds(r0, rm), :])
            o_ref[:, pl.ds(r0, rm)] = y_t.astype(o_ref.dtype)
            return carry

        jax.lax.fori_loop(0, n_sub, body, 0)


def pinn_forward(x, params, *, bm=1024, rm=256, matmul_dtype=jnp.float32):
    """x: (B, INPUT_DIM) float32. Returns (B, OUTPUT_DIM) float32."""
    w1, b1, w2, b2, w3, b3 = params  # (4,64),(1,64),(64,64),(1,64),(64,2),(1,2)
    B = x.shape[0]

    if B >= bm:
        assert bm % rm == 0 and rm % 128 == 0, \
            "bm must be a multiple of rm, and rm a multiple of 128"
        bm_eff, rm_eff = bm, rm
    else:
        # Small batch: single tile covering the (8-rounded) batch.
        bm_eff = _round_up(max(B, 1), 8)
        rm_eff = bm_eff

    B_pad = _round_up(B, bm_eff)
    x_p = x.astype(jnp.float32)
    if B_pad != B:
        x_p = jnp.pad(x_p, ((0, B_pad - B), (0, 0)))

    # Kernel-side layouts.
    w1_k = w1.astype(jnp.float32)                             # (4, 64)  f32 (VPU layer)
    b1_k = b1.reshape(1, HIDDEN_DIM).astype(jnp.float32)      # (1, 64)
    w2_k = w2.astype(matmul_dtype)                            # (64, 64)
    b2_k = b2.reshape(1, HIDDEN_DIM).astype(jnp.float32)      # (1, 64)
    w3_k = w3.T.astype(matmul_dtype)                          # (2, 64)  (out, in)
    b3_k = b3.reshape(1, OUTPUT_DIM).T.astype(jnp.float32)    # (2, 1)

    grid = (B_pad // bm_eff,)
    rep = lambda shp: pl.BlockSpec(shp, lambda i: (0, 0))     # resident weights

    flops = 2 * B_pad * (INPUT_DIM * HIDDEN_DIM
                         + HIDDEN_DIM * HIDDEN_DIM
                         + HIDDEN_DIM * OUTPUT_DIM)
    transcendentals = 2 * HIDDEN_DIM * B_pad
    bytes_accessed = (
        x_p.size * 4
        + w1_k.size * 4 + b1_k.size * 4
        + w2_k.size * w2_k.dtype.itemsize + b2_k.size * 4
        + w3_k.size * w3_k.dtype.itemsize + b3_k.size * 4
        + OUTPUT_DIM * B_pad * 4)
    cost = pl.CostEstimate(flops=flops, transcendentals=transcendentals,
                           bytes_accessed=bytes_accessed)

    out_t = pl.pallas_call(
        functools.partial(_pinn_kernel, rm=rm_eff, matmul_dtype=matmul_dtype),
        out_shape=jax.ShapeDtypeStruct((OUTPUT_DIM, B_pad), jnp.float32),
        grid_spec=pltpu.PrefetchScalarGridSpec(
            num_scalar_prefetch=0,
            grid=grid,
            in_specs=[
                pl.BlockSpec((bm_eff, INPUT_DIM), lambda i: (i, 0)),  # x tile
                rep((INPUT_DIM, HIDDEN_DIM)),    # w1 (resident)
                rep((1, HIDDEN_DIM)),            # b1
                rep((HIDDEN_DIM, HIDDEN_DIM)),   # w2
                rep((1, HIDDEN_DIM)),            # b2
                rep((OUTPUT_DIM, HIDDEN_DIM)),   # w3 (out, in)
                rep((OUTPUT_DIM, 1)),            # b3
            ],
            out_specs=pl.BlockSpec((OUTPUT_DIM, bm_eff), lambda i: (0, i)),
        ),
        compiler_params=pltpu.CompilerParams(
            dimension_semantics=("parallel",),
        ),
        cost_estimate=cost,
    )(x_p, w1_k, b1_k, w2_k, b2_k, w3_k, b3_k)

    return out_t[:, :B].T


def init_params(key):
    """Deterministic init mimicking PyTorch nn.Linear default:
    U(-1/sqrt(fan_in), 1/sqrt(fan_in)) for both weight and bias.
    Weights stored (in_features, out_features) so y = x @ W + b."""
    def linear(key, fan_in, fan_out):
        kw, kb = jax.random.split(key)
        bound = 1.0 / jnp.sqrt(float(fan_in))
        w = jax.random.uniform(kw, (fan_in, fan_out), jnp.float32, -bound, bound)
        b = jax.random.uniform(kb, (1, fan_out), jnp.float32, -bound, bound)
        return w, b

    k1, k2, k3 = jax.random.split(key, 3)
    w1, b1 = linear(k1, INPUT_DIM, HIDDEN_DIM)
    w2, b2 = linear(k2, HIDDEN_DIM, HIDDEN_DIM)
    w3, b3 = linear(k3, HIDDEN_DIM, OUTPUT_DIM)
    return (w1, b1, w2, b2, w3, b3)


def pinn_reference(x, params, matmul_dtype=jnp.float32):
    w1, b1, w2, b2, w3, b3 = params
    h1 = jnp.tanh(x @ w1 + b1)
    h2 = jnp.tanh(jnp.dot(h1.astype(matmul_dtype), w2.astype(matmul_dtype),
                          preferred_element_type=jnp.float32) + b2)
    return jnp.dot(h2.astype(matmul_dtype), w3.astype(matmul_dtype),
                   preferred_element_type=jnp.float32) + b3


if __name__ == "__main__":
    key = jax.random.PRNGKey(0)
    kp, kx1, kx2 = jax.random.split(key, 3)
    params = init_params(kp)

    # 1) Small batch: single-tile path (bm clamps to the batch).
    B1 = 32
    x1 = jax.random.normal(kx1, (B1, INPUT_DIM), dtype=jnp.float32)
    out1 = jax.block_until_ready(pinn_forward(x1, params))
    ref1 = pinn_reference(x1, params)
    assert out1.shape == (B1, OUTPUT_DIM)
    assert jnp.allclose(out1, ref1, atol=1e-4, rtol=1e-4)

    # 2) Ragged batch: exercises padding, a 2-step grid and the in-kernel
    #    sub-chunk loop (bm=256, rm=128 -> 2 sub-chunks per tile).
    B2 = 300
    x2 = jax.random.normal(kx2, (B2, INPUT_DIM), dtype=jnp.float32)
    out2 = jax.block_until_ready(pinn_forward(x2, params, bm=256, rm=128))
    ref2 = pinn_reference(x2, params)
    assert out2.shape == (B2, OUTPUT_DIM)
    assert jnp.allclose(out2, ref2, atol=1e-4, rtol=1e-4)

    # 3) bf16-input MXU path (f32 accumulation), compared to a bf16 reference.
    out3 = jax.block_until_ready(
        pinn_forward(x2, params, bm=256, rm=128, matmul_dtype=jnp.bfloat16))
    ref3 = pinn_reference(x2, params, matmul_dtype=jnp.bfloat16)
    assert jnp.allclose(out3, ref3, atol=1e-2, rtol=1e-2)

    print("KERNEL_OK")
</pallas_src>

<mosaic_0001>
module attributes {stable_mosaic.version = 11 : i64} {
  func.func @_pinn_kernel(%arg0: i32, %arg1: memref<32x4xf32, #tpu.memory_space<vmem>>, %arg2: memref<4x64xf32, #tpu.memory_space<vmem>>, %arg3: memref<1x64xf32, #tpu.memory_space<vmem>>, %arg4: memref<64x64xf32, #tpu.memory_space<vmem>>, %arg5: memref<1x64xf32, #tpu.memory_space<vmem>>, %arg6: memref<2x64xf32, #tpu.memory_space<vmem>>, %arg7: memref<2x1xf32, #tpu.memory_space<vmem>>, %arg8: memref<2x32xf32, #tpu.memory_space<vmem>>) attributes {dimension_semantics = [#tpu.dimension_semantics<parallel>], iteration_bounds = array<i64: 1>, scalar_prefetch = 0 : i64, scratch_operands = 0 : i64, tpu.core_type = #tpu.core_type<tc>, window_params = [{transform_indices = @transform_0, window_bounds = array<i64: 32, 4>}, {pipeline_mode = #tpu.pipeline_mode<synchronous>, transform_indices = @transform_1, window_bounds = array<i64: 4, 64>}, {pipeline_mode = #tpu.pipeline_mode<synchronous>, transform_indices = @transform_2, window_bounds = array<i64: 1, 64>}, {pipeline_mode = #tpu.pipeline_mode<synchronous>, transform_indices = @transform_3, window_bounds = array<i64: 64, 64>}, {pipeline_mode = #tpu.pipeline_mode<synchronous>, transform_indices = @transform_4, window_bounds = array<i64: 1, 64>}, {pipeline_mode = #tpu.pipeline_mode<synchronous>, transform_indices = @transform_5, window_bounds = array<i64: 2, 64>}, {pipeline_mode = #tpu.pipeline_mode<synchronous>, transform_indices = @transform_6, window_bounds = array<i64: 2, 1>}, {transform_indices = @transform_7, window_bounds = array<i64: 2, 32>}]} {
    %c0 = arith.constant 0 : index
    %c0_0 = arith.constant 0 : index
    %0 = vector.load %arg1[%c0, %c0_0] : memref<32x4xf32, #tpu.memory_space<vmem>>, vector<32x4xf32>
    %c0_1 = arith.constant 0 : index
    %c0_2 = arith.constant 0 : index
    %1 = vector.load %arg3[%c0_1, %c0_2] : memref<1x64xf32, #tpu.memory_space<vmem>>, vector<1x64xf32>
    %2 = vector.extract_strided_slice %0 {offsets = [0, 0], sizes = [32, 1], strides = [1, 1]} : vector<32x4xf32> to vector<32x1xf32>
    %c0_3 = arith.constant 0 : index
    %c0_4 = arith.constant 0 : index
    %3 = vector.load %arg2[%c0_3, %c0_4] : memref<4x64xf32, #tpu.memory_space<vmem>>, vector<1x64xf32>
    %4 = vector.broadcast %2 : vector<32x1xf32> to vector<32x64xf32>
    %5 = vector.broadcast %3 : vector<1x64xf32> to vector<32x64xf32>
    %6 = arith.mulf %4, %5 : vector<32x64xf32>
    %7 = vector.broadcast %1 : vector<1x64xf32> to vector<32x64xf32>
    %8 = arith.addf %7, %6 : vector<32x64xf32>
    %9 = vector.extract_strided_slice %0 {offsets = [0, 1], sizes = [32, 1], strides = [1, 1]} : vector<32x4xf32> to vector<32x1xf32>
    %c1 = arith.constant 1 : index
    %c0_5 = arith.constant 0 : index
    %10 = vector.load %arg2[%c1, %c0_5] : memref<4x64xf32, #tpu.memory_space<vmem>>, vector<1x64xf32>
    %11 = vector.broadcast %9 : vector<32x1xf32> to vector<32x64xf32>
    %12 = vector.broadcast %10 : vector<1x64xf32> to vector<32x64xf32>
    %13 = arith.mulf %11, %12 : vector<32x64xf32>
    %14 = arith.addf %8, %13 : vector<32x64xf32>
    %15 = vector.extract_strided_slice %0 {offsets = [0, 2], sizes = [32, 1], strides = [1, 1]} : vector<32x4xf32> to vector<32x1xf32>
    %c2 = arith.constant 2 : index
    %c0_6 = arith.constant 0 : index
    %16 = vector.load %arg2[%c2, %c0_6] : memref<4x64xf32, #tpu.memory_space<vmem>>, vector<1x64xf32>
    %17 = vector.broadcast %15 : vector<32x1xf32> to vector<32x64xf32>
    %18 = vector.broadcast %16 : vector<1x64xf32> to vector<32x64xf32>
    %19 = arith.mulf %17, %18 : vector<32x64xf32>
    %20 = arith.addf %14, %19 : vector<32x64xf32>
    %21 = vector.extract_strided_slice %0 {offsets = [0, 3], sizes = [32, 1], strides = [1, 1]} : vector<32x4xf32> to vector<32x1xf32>
    %c3 = arith.constant 3 : index
    %c0_7 = arith.constant 0 : index
    %22 = vector.load %arg2[%c3, %c0_7] : memref<4x64xf32, #tpu.memory_space<vmem>>, vector<1x64xf32>
    %23 = vector.broadcast %21 : vector<32x1xf32> to vector<32x64xf32>
    %24 = vector.broadcast %22 : vector<1x64xf32> to vector<32x64xf32>
    %25 = arith.mulf %23, %24 : vector<32x64xf32>
    %26 = arith.addf %20, %25 : vector<32x64xf32>
    %27 = math.tanh %26 : vector<32x64xf32>
    %c0_8 = arith.constant 0 : index
    %c0_9 = arith.constant 0 : index
    %28 = vector.load %arg4[%c0_8, %c0_9] : memref<64x64xf32, #tpu.memory_space<vmem>>, vector<64x64xf32>
    %cst = arith.constant dense<0.000000e+00> : vector<32x64xf32>
    %29 = tpu.matmul %27, %28, %cst {dimension_numbers = #tpu.dot_dimension_numbers<[1], [0], [0], [1], [0, 0, 1, 1], [], []>} : vector<32x64xf32>, vector<64x64xf32>, vector<32x64xf32> -> vector<32x64xf32>
    %c0_10 = arith.constant 0 : index
    %c0_11 = arith.constant 0 : index
    %30 = vector.load %arg5[%c0_10, %c0_11] : memref<1x64xf32, #tpu.memory_space<vmem>>, vector<1x64xf32>
    %31 = vector.broadcast %30 : vector<1x64xf32> to vector<32x64xf32>
    %32 = arith.addf %29, %31 : vector<32x64xf32>
    %33 = math.tanh %32 : vector<32x64xf32>
    %c0_12 = arith.constant 0 : index
    %c0_13 = arith.constant 0 : index
    %34 = vector.load %arg6[%c0_12, %c0_13] : memref<2x64xf32, #tpu.memory_space<vmem>>, vector<2x64xf32>
    %cst_14 = arith.constant dense<0.000000e+00> : vector<2x32xf32>
    %35 = tpu.matmul %34, %33, %cst_14 {dimension_numbers = #tpu.dot_dimension_numbers<[1], [1], [0], [0], [0, 0, 1, 0], [], []>} : vector<2x64xf32>, vector<32x64xf32>, vector<2x32xf32> -> vector<2x32xf32>
    %c0_15 = arith.constant 0 : index
    %c0_16 = arith.constant 0 : index
    %36 = vector.load %arg7[%c0_15, %c0_16] : memref<2x1xf32, #tpu.memory_space<vmem>>, vector<2x1xf32>
    %37 = vector.broadcast %36 : vector<2x1xf32> to vector<2x32xf32>
    %38 = arith.addf %35, %37 : vector<2x32xf32>
    %c0_17 = arith.constant 0 : index
    %c0_18 = arith.constant 0 : index
    %39 = vector.load %arg8[%c0_17, %c0_18] : memref<2x32xf32, #tpu.memory_space<vmem>>, vector<2x32xf32>
    tpu.vector_store %arg8[%c0_17, %c0_18], %38 {strides = array<i32>} : memref<2x32xf32, #tpu.memory_space<vmem>>, vector<2x32xf32>,
    return
  }
  func.func @transform_0(%arg0: i32) -> (i32, i32) {
    %c0_i32 = arith.constant 0 : i32
    %c0_i32_0 = arith.constant 0 : i32
    return %arg0, %c0_i32 : i32, i32
  }
  func.func @transform_1(%arg0: i32) -> (i32, i32) {
    %c0_i32 = arith.constant 0 : i32
    %c0_i32_0 = arith.constant 0 : i32
    %c0_i32_1 = arith.constant 0 : i32
    return %c0_i32, %c0_i32_0 : i32, i32
  }
  func.func @transform_2(%arg0: i32) -> (i32, i32) {
    %c0_i32 = arith.constant 0 : i32
    %c0_i32_0 = arith.constant 0 : i32
    %c0_i32_1 = arith.constant 0 : i32
    return %c0_i32, %c0_i32_0 : i32, i32
  }
  func.func @transform_3(%arg0: i32) -> (i32, i32) {
    %c0_i32 = arith.constant 0 : i32
    %c0_i32_0 = arith.constant 0 : i32
    %c0_i32_1 = arith.constant 0 : i32
    return %c0_i32, %c0_i32_0 : i32, i32
  }
  func.func @transform_4(%arg0: i32) -> (i32, i32) {
    %c0_i32 = arith.constant 0 : i32
    %c0_i32_0 = arith.constant 0 : i32
    %c0_i32_1 = arith.constant 0 : i32
    return %c0_i32, %c0_i32_0 : i32, i32
  }
  func.func @transform_5(%arg0: i32) -> (i32, i32) {
    %c0_i32 = arith.constant 0 : i32
    %c0_i32_0 = arith.constant 0 : i32
    %c0_i32_1 = arith.constant 0 : i32
    return %c0_i32, %c0_i32_0 : i32, i32
  }
  func.func @transform_6(%arg0: i32) -> (i32, i32) {
    %c0_i32 = arith.constant 0 : i32
    %c0_i32_0 = arith.constant 0 : i32
    %c0_i32_1 = arith.constant 0 : i32
    return %c0_i32, %c0_i32_0 : i32, i32
  }
  func.func @transform_7(%arg0: i32) -> (i32, i32) {
    %c0_i32 = arith.constant 0 : i32
    %c0_i32_0 = arith.constant 0 : i32
    return %c0_i32, %arg0 : i32, i32
  }
}

</mosaic_0001>

<llo_original>
// kernel: tpu_custom_call.1
$region0: #{tpu_custom_call.1}
  #allocation0 [shape = 'u32[]', space=smem, size = 0x4, offset = 0x4, fixed_abs, tag = 'smem constant byte address 0x4 - core index']
  #allocation1 [shape = 'u32[144,128]{1,0:T(1,128)}', space=vmem, size = 0x12000, scoped, tag = 'internal scratch']
  %s0 = inlined_call_operand.vmem [shape: f32[32,4], index: 0, kind: input, shape index: {}]
  %s1 = inlined_call_operand.vmem [shape: f32[4,64], index: 1, kind: input, shape index: {}]
  %s2 = inlined_call_operand.vmem [shape: f32[1,64], index: 2, kind: input, shape index: {}]
  %s3 = inlined_call_operand.hbm [shape: f32[64,64], index: 3, kind: input, shape index: {}]
  %s4 = inlined_call_operand.vmem [shape: f32[1,64], index: 4, kind: input, shape index: {}]
  %s5 = inlined_call_operand.vmem [shape: f32[2,64], index: 5, kind: input, shape index: {}]
  %s6 = inlined_call_operand.vmem [shape: f32[2,1], index: 6, kind: input, shape index: {}]
  %s7 = inlined_call_operand.hbm [shape: f32[2,32], index: 7, kind: output, shape index: {}]
  %s8 = sld [smem:[#allocation0]]
  $region42: #{tpu_custom_call.1} parent=0
    _
  %s10 = ssub.s32 1, %s8
  %s11 = scalar_select 0, %s10, %s8
  $region1: #{tpu_custom_call.1} parent=0
    #allocation2 [shape = 'u8[32768]{0}', space=vmem, size = 0x8000, scoped, tag = 'input window, operand 3, single buffered']
    #allocation3 [shape = 's32[1]{0}', space=sflag, size = 0x4, scoped, tag = 'scoped memory for tpu_custom_call.1']
    #allocation4 [shape = 's32[1]{0}', space=sflag, size = 0x4, scoped, tag = 'scoped memory for tpu_custom_call.1']
    #allocation5 [shape = 'u8[1024]{0}', space=vmem, size = 0x400, scoped, tag = 'output window, operand 0, single buffered']
    %12 = vsyncpa [#allocation3], 0
    %13 = vsyncpa [#allocation4], 0
    // Predicated region
    $region2: #{tpu_custom_call.1} parent=1 // pred_check
      _
    $region3: #{tpu_custom_call.1} parent=1 // pred_check_branch
      %15 = sbr.rel (0) target = $region5
    $region4: #{tpu_custom_call.1} parent=1 // pred_region
      _
    $region5: #{tpu_custom_call.1} parent=1 // pred_fallthru
      _
    // Predicated region
    $region6: #{tpu_custom_call.1} parent=1 // pred_check
      _
    $region7: #{tpu_custom_call.1} parent=1 // pred_check_branch
      %17 = sbr.rel (0) target = $region9
    $region8: #{tpu_custom_call.1} parent=1 // pred_region
      _
    $region9: #{tpu_custom_call.1} parent=1 // pred_fallthru
      _
    // Predicated region
    $region10: #{tpu_custom_call.1} parent=1 // pred_check
      _
    $region11: #{tpu_custom_call.1} parent=1 // pred_check_branch
      %19 = sbr.rel (0) target = $region13
    $region12: #{tpu_custom_call.1} parent=1 // pred_region
      _
    $region13: #{tpu_custom_call.1} parent=1 // pred_fallthru
      _
    // Predicated region
    $region14: #{tpu_custom_call.1} parent=1 // pred_check
      _
    $region15: #{tpu_custom_call.1} parent=1 // pred_check_branch
      %21 = sbr.rel (0) target = $region17
    $region16: #{tpu_custom_call.1} parent=1 // pred_region
      %s23 = ssub.s32 1024, 1024
      %24 = vsyncadd [#allocation3], %s23
      %s25 = sshll.u32 [#allocation2], 4
      %s26 = int_to_ptr.vmem [resolvable:$true] %s25
      %31 = dma.hbm_to_vmem [thread:$0]  %s3, 1024, %s26, [#allocation3], 128, 128, 8
    $region17: #{tpu_custom_call.1} parent=1 // pred_fallthru
      _
    // Predicated region
    $region18: #{tpu_custom_call.1} parent=1 // pred_check
      _
    $region19: #{tpu_custom_call.1} parent=1 // pred_check_branch
      %33 = sbr.rel (0) target = $region21
    $region20: #{tpu_custom_call.1} parent=1 // pred_region
      _
    $region21: #{tpu_custom_call.1} parent=1 // pred_fallthru
      _
    // Predicated region
    $region22: #{tpu_custom_call.1} parent=1 // pred_check
      _
    $region23: #{tpu_custom_call.1} parent=1 // pred_check_branch
      %35 = sbr.rel (0) target = $region25
    $region24: #{tpu_custom_call.1} parent=1 // pred_region
      _
    $region25: #{tpu_custom_call.1} parent=1 // pred_fallthru
      _
    // Predicated region
    $region26: #{tpu_custom_call.1} parent=1 // pred_check
      _
    $region27: #{tpu_custom_call.1} parent=1 // pred_check_branch
      %37 = sbr.rel (0) target = $region29
    $region28: #{tpu_custom_call.1} parent=1 // pred_region
      _
    $region29: #{tpu_custom_call.1} parent=1 // pred_fallthru
      _
    // Predicated region
    $region30: #{tpu_custom_call.1} parent=1 // pred_check
      _
    $region31: #{tpu_custom_call.1} parent=1 // pred_check_branch
      %39 = sbr.rel (0) target = $region33
    $region32: #{tpu_custom_call.1} parent=1 // pred_region
      %40 = dma.done [#allocation3], 1024
    $region33: #{tpu_custom_call.1} parent=1 // pred_fallthru
      _
    %v41 = vld [vmem:[%s0] sm:$0xff]
    %v42 = vld [vmem:[%s0 + $0x8] sm:$0xff]
    %v43 = vld [vmem:[%s0 + $0x10] sm:$0xff]
    %v44 = vld [vmem:[%s0 + $0x18] sm:$0xff]
    %v45 = vld [vmem:[%s2] sm:$0x1]
    %v46 = vld [vmem:[%s1] sm:$0x1]
    %48 = vset.pattern.permute.xlu0 0
    %49 = vperm.xlu0 %48, %v41
    %v50 = vpop.permute.xlu0 %49
    %53 = vset.pattern.permute.xlu0 0
    %54 = vperm.xlu0 %53, %v42
    %v55 = vpop.permute.xlu0 %54
    %58 = vset.pattern.permute.xlu0 0
    %59 = vperm.xlu0 %58, %v43
    %v60 = vpop.permute.xlu0 %59
    %63 = vset.pattern.permute.xlu0 0
    %64 = vperm.xlu0 %63, %v44
    %v65 = vpop.permute.xlu0 %64
    %v67 = vlaneseq
    %v68 = vshrl.u32 %v67, 7
    %v69 = vsub.s32 0, %v68
    %v70 = vrot.slane %v46, %v69
    %v71 = vmul.f32 %v50, %v70
    %v72 = vmul.f32 %v55, %v70
    %v73 = vmul.f32 %v60, %v70
    %v74 = vmul.f32 %v65, %v70
    %v76 = vlaneseq
    %v77 = vshrl.u32 %v76, 7
    %v78 = vsub.s32 0, %v77
    %v79 = vrot.slane %v45, %v78
    %v81 = vadd.f32 %v79, %v71
    %v82 = vadd.f32 %v79, %v72
    %v83 = vadd.f32 %v79, %v73
    %v84 = vadd.f32 %v79, %v74
    %v85 = vld [vmem:[%s1 + $0x1] sm:$0x1]
    %86 = vset.pattern.permute.xlu0 1
    %87 = vperm.xlu0 %86, %v41
    %v88 = vpop.permute.xlu0 %87
    %90 = vset.pattern.permute.xlu0 1
    %91 = vperm.xlu0 %90, %v42
    %v92 = vpop.permute.xlu0 %91
    %94 = vset.pattern.permute.xlu0 1
    %95 = vperm.xlu0 %94, %v43
    %v96 = vpop.permute.xlu0 %95
    %98 = vset.pattern.permute.xlu0 1
    %99 = vperm.xlu0 %98, %v44
    %v100 = vpop.permute.xlu0 %99
    %v102 = vlaneseq
    %v103 = vshrl.u32 %v102, 7
    %v104 = vsub.s32 0, %v103
    %v105 = vrot.slane %v85, %v104
    %v106 = vmul.f32 %v88, %v105
    %v107 = vmul.f32 %v92, %v105
    %v108 = vmul.f32 %v96, %v105
    %v109 = vmul.f32 %v100, %v105
    %v110 = vadd.f32 %v81, %v106
    %v111 = vadd.f32 %v82, %v107
    %v112 = vadd.f32 %v83, %v108
    %v113 = vadd.f32 %v84, %v109
    %v114 = vld [vmem:[%s1 + $0x2] sm:$0x1]
    %115 = vset.pattern.permute.xlu0 2
    %116 = vperm.xlu0 %115, %v41
    %v117 = vpop.permute.xlu0 %116
    %119 = vset.pattern.permute.xlu0 2
    %120 = vperm.xlu0 %119, %v42
    %v121 = vpop.permute.xlu0 %120
    %123 = vset.pattern.permute.xlu0 2
    %124 = vperm.xlu0 %123, %v43
    %v125 = vpop.permute.xlu0 %124
    %127 = vset.pattern.permute.xlu0 2
    %128 = vperm.xlu0 %127, %v44
    %v129 = vpop.permute.xlu0 %128
    %v131 = vlaneseq
    %v132 = vshrl.u32 %v131, 7
    %v133 = vsub.s32 0, %v132
    %v134 = vrot.slane %v114, %v133
    %v135 = vmul.f32 %v117, %v134
    %v136 = vmul.f32 %v121, %v134
    %v137 = vmul.f32 %v125, %v134
    %v138 = vmul.f32 %v129, %v134
    %v139 = vadd.f32 %v110, %v135
    %v140 = vadd.f32 %v111, %v136
    %v141 = vadd.f32 %v112, %v137
    %v142 = vadd.f32 %v113, %v138
    %v143 = vld [vmem:[%s1 + $0x3] sm:$0x1]
    %144 = vset.pattern.permute.xlu0 3
    %145 = vperm.xlu0 %144, %v41
    %v146 = vpop.permute.xlu0 %145
    %148 = vset.pattern.permute.xlu0 3
    %149 = vperm.xlu0 %148, %v42
    %v150 = vpop.permute.xlu0 %149
    %152 = vset.pattern.permute.xlu0 3
    %153 = vperm.xlu0 %152, %v43
    %v154 = vpop.permute.xlu0 %153
    %156 = vset.pattern.permute.xlu0 3
    %157 = vperm.xlu0 %156, %v44
    %v158 = vpop.permute.xlu0 %157
    %v160 = vlaneseq
    %v161 = vshrl.u32 %v160, 7
    %v162 = vsub.s32 0, %v161
    %v163 = vrot.slane %v143, %v162
    %v164 = vmul.f32 %v146, %v163
    %v165 = vmul.f32 %v150, %v163
    %v166 = vmul.f32 %v154, %v163
    %v167 = vmul.f32 %v158, %v163
    %v168 = vadd.f32 %v139, %v164
    %v169 = vadd.f32 %v140, %v165
    %v170 = vadd.f32 %v141, %v166
    %v171 = vadd.f32 %v142, %v167
    %v172 = vtanh.pop %v168
    %v173 = vtanh.pop %v169
    %v174 = vtanh.pop %v170
    %v175 = vtanh.pop %v171
    %v176 = vld [vmem:[#allocation2] sm:$0xff]
    %v177 = vld [vmem:[#allocation2 + $0x8] sm:$0xff]
    %v178 = vld [vmem:[#allocation2 + $0x10] sm:$0xff]
    %v179 = vld [vmem:[#allocation2 + $0x18] sm:$0xff]
    %v180 = vld [vmem:[#allocation2 + $0x20] sm:$0xff]
    %v181 = vld [vmem:[#allocation2 + $0x28] sm:$0xff]
    %v182 = vld [vmem:[#allocation2 + $0x30] sm:$0xff]
    %v183 = vld [vmem:[#allocation2 + $0x38] sm:$0xff]
    %v184 = vld [vmem:[%s4] sm:$0x1]
    %v186 = vlaneseq
    %v187 = vshrl.u32 %v186, 7
    %v188 = vsub.s32 0, %v187
    %v189 = vrot.slane %v184, %v188
    %vm191 = vcmask 523264
    %v193 = vsel %vm191, %v172, 0
    %v196 = vsel %vm191, %v173, 0
    %v199 = vsel %vm191, %v174, 0
    %v202 = vsel %vm191, %v175, 0
    %204 = vmatprep.subr.mxu0 0.0
    %205 = vmatpush1.msra.mxu0 %v176
    %206 = vmatprep.subr.mxu0 0.0
    %207 = vmatpush1.msra.mxu0 %v177
    %208 = vmatprep.subr.mxu0 0.0
    %209 = vmatpush1.msra.mxu0 %v178
    %210 = vmatprep.subr.mxu0 0.0
    %211 = vmatpush1.msra.mxu0 %v179
    %212 = vmatprep.subr.mxu0 0.0
    %213 = vmatpush1.msra.mxu0 %v180
    %214 = vmatprep.subr.mxu0 0.0
    %215 = vmatpush1.msra.mxu0 %v181
    %216 = vmatprep.subr.mxu0 0.0
    %217 = vmatpush1.msra.mxu0 %v182
    %218 = vmatprep.subr.mxu0 0.0
    %219 = vmatpush1.msra.mxu0 %v183
    %220 = vmatprep.subr.mxu0 0.0
    %221 = vmatpush1.msra.mxu0 0.0
    %222 = vmatprep.subr.mxu0 0.0
    %223 = vmatpush1.msra.mxu0 0.0
    %224 = vmatprep.subr.mxu0 0.0
    %225 = vmatpush1.msra.mxu0 0.0
    %226 = vmatprep.subr.mxu0 0.0
    %227 = vmatpush1.msra.mxu0 0.0
    %228 = vmatprep.subr.mxu0 0.0
    %229 = vmatpush1.msra.mxu0 0.0
    %230 = vmatprep.subr.mxu0 0.0
    %231 = vmatpush1.msra.mxu0 0.0
    %232 = vmatprep.subr.mxu0 0.0
    %233 = vmatpush1.msra.mxu0 0.0
    %234 = vmatprep.subr.mxu0 0.0
    %235 = vmatpush1.msra.mxu0 0.0
    %236 = vmatprep.subr.mxu0 0.0
    %237 = vmatpush1.msra.mxu0 0.0
    %238 = vmatprep.subr.mxu0 0.0
    %239 = vmatpush1.msra.mxu0 0.0
    %240 = vmatprep.subr.mxu0 0.0
    %241 = vmatpush1.msra.mxu0 0.0
    %242 = vmatprep.subr.mxu0 0.0
    %243 = vmatpush1.msra.mxu0 0.0
    %244 = vmatprep.subr.mxu0 0.0
    %245 = vmatpush1.msra.mxu0 0.0
    %246 = vmatprep.subr.mxu0 0.0
    %247 = vmatpush1.msra.mxu0 0.0
    %248 = vmatprep.subr.mxu0 0.0
    %249 = vmatpush1.msra.mxu0 0.0
    %250 = vmatprep.subr.mxu0 0.0
    %251 = vmatpush1.msra.mxu0 0.0
    %252 = vmatprep.subr.mxu0 0.0
    %253 = vmatpush1.msra.mxu0 0.0
    %254 = vmatprep.subr.mxu0 0.0
    %255 = vmatpush1.msra.mxu0 0.0
    %256 = vmatprep.subr.mxu0 0.0
    %257 = vmatpush1.msra.mxu0 0.0
    %258 = vmatprep.subr.mxu0 0.0
    %259 = vmatpush1.msra.mxu0 0.0
    %260 = vmatprep.subr.mxu0 0.0
    %261 = vmatpush1.msra.mxu0 0.0
    %262 = vmatprep.subr.mxu0 0.0
    %263 = vmatpush1.msra.mxu0 0.0
    %264 = vmatprep.subr.mxu0 0.0
    %265 = vmatpush1.msra.mxu0 0.0
    %266 = vmatprep.subr.mxu0 0.0
    %267 = vmatpush1.msra.mxu0 0.0
    %268 = vmatprep.mubr.f32.mxu0 0.0
    %269 = vmatmul.mubr.f32.gmra.mrb[0].mxu0 %v193
    %v270 = vpop.f32.mrb[0].mxu0
    %v271 = vadd.f32 %v189, %v270
    %v272 = vpop.f32.mrb[0].mxu0
    %273 = vmatprep.mubr.f32.mxu0 0.0
    %274 = vmatmul.mubr.f32.gmra.mrb[0].mxu0 %v196
    %v275 = vpop.f32.mrb[0].mxu0
    %v276 = vadd.f32 %v189, %v275
    %v277 = vpop.f32.mrb[0].mxu0
    %278 = vmatprep.mubr.f32.mxu0 0.0
    %279 = vmatmul.mubr.f32.gmra.mrb[0].mxu0 %v199
    %v280 = vpop.f32.mrb[0].mxu0
    %v281 = vadd.f32 %v189, %v280
    %v282 = vpop.f32.mrb[0].mxu0
    %283 = vmatprep.mubr.f32.mxu0 0.0
    %284 = vmatmul.mubr.f32.gmra.mrb[0].mxu0 %v202
    %v285 = vpop.f32.mrb[0].mxu0
    %v286 = vadd.f32 %v189, %v285
    %v287 = vpop.f32.mrb[0].mxu0
    %288 = vdwg.mxu0
    %v289 = vtanh.pop %v271
    %v290 = vtanh.pop %v276
    %v291 = vtanh.pop %v281
    %v292 = vtanh.pop %v286
    %v293 = vld [vmem:[%s5] sm:$0x3]
    %v294 = vld [vmem:[%s6] sm:$0x3]
    %296 = vset.pattern.permute.xlu0 0
    %297 = vperm.xlu0 %296, %v294
    %v298 = vpop.permute.xlu0 %297
    %v301 = vsel %vm191, %v293, 0
    %v304 = vsel %vm191, %v289, 0
    %v307 = vsel %vm191, %v290, 0
    %v310 = vsel %vm191, %v291, 0
    %v313 = vsel %vm191, %v292, 0
    %315 = vmatprep.subr.mxu0 0.0
    %316 = vmatpush1.xpose.msra.mxu0 %v304
    %317 = vmatprep.subr.mxu0 0.0
    %318 = vmatpush1.xpose.msra.mxu0 %v307
    %319 = vmatprep.subr.mxu0 0.0
    %320 = vmatpush1.xpose.msra.mxu0 %v310
    %321 = vmatprep.subr.mxu0 0.0
    %322 = vmatpush1.xpose.msra.mxu0 %v313
    %323 = vmatprep.subr.mxu0 0.0
    %324 = vmatpush1.xpose.msra.mxu0 0.0
    %325 = vmatprep.subr.mxu0 0.0
    %326 = vmatpush1.xpose.msra.mxu0 0.0
    %327 = vmatprep.subr.mxu0 0.0
    %328 = vmatpush1.xpose.msra.mxu0 0.0
    %329 = vmatprep.subr.mxu0 0.0
    %330 = vmatpush1.xpose.msra.mxu0 0.0
    %331 = vmatprep.subr.mxu0 0.0
    %332 = vmatpush1.xpose.msra.mxu0 0.0
    %333 = vmatprep.subr.mxu0 0.0
    %334 = vmatpush1.xpose.msra.mxu0 0.0
    %335 = vmatprep.subr.mxu0 0.0
    %336 = vmatpush1.xpose.msra.mxu0 0.0
    %337 = vmatprep.subr.mxu0 0.0
    %338 = vmatpush1.xpose.msra.mxu0 0.0
    %339 = vmatprep.subr.mxu0 0.0
    %340 = vmatpush1.xpose.msra.mxu0 0.0
    %341 = vmatprep.subr.mxu0 0.0
    %342 = vmatpush1.xpose.msra.mxu0 0.0
    %343 = vmatprep.subr.mxu0 0.0
    %344 = vmatpush1.xpose.msra.mxu0 0.0
    %345 = vmatprep.subr.mxu0 0.0
    %346 = vmatpush1.xpose.msra.mxu0 0.0
    %347 = vmatprep.subr.mxu0 0.0
    %348 = vmatpush1.xpose.msra.mxu0 0.0
    %349 = vmatprep.subr.mxu0 0.0
    %350 = vmatpush1.xpose.msra.mxu0 0.0
    %351 = vmatprep.subr.mxu0 0.0
    %352 = vmatpush1.xpose.msra.mxu0 0.0
    %353 = vmatprep.subr.mxu0 0.0
    %354 = vmatpush1.xpose.msra.mxu0 0.0
    %355 = vmatprep.subr.mxu0 0.0
    %356 = vmatpush1.xpose.msra.mxu0 0.0
    %357 = vmatprep.subr.mxu0 0.0
    %358 = vmatpush1.xpose.msra.mxu0 0.0
    %359 = vmatprep.subr.mxu0 0.0
    %360 = vmatpush1.xpose.msra.mxu0 0.0
    %361 = vmatprep.subr.mxu0 0.0
    %362 = vmatpush1.xpose.msra.mxu0 0.0
    %363 = vmatprep.subr.mxu0 0.0
    %364 = vmatpush1.xpose.msra.mxu0 0.0
    %365 = vmatprep.subr.mxu0 0.0
    %366 = vmatpush1.xpose.msra.mxu0 0.0
    %367 = vmatprep.subr.mxu0 0.0
    %368 = vmatpush1.xpose.msra.mxu0 0.0
    %369 = vmatprep.subr.mxu0 0.0
    %370 = vmatpush1.xpose.msra.mxu0 0.0
    %371 = vmatprep.subr.mxu0 0.0
    %372 = vmatpush1.xpose.msra.mxu0 0.0
    %373 = vmatprep.subr.mxu0 0.0
    %374 = vmatpush1.xpose.msra.mxu0 0.0
    %375 = vmatprep.subr.mxu0 0.0
    %376 = vmatpush1.xpose.msra.mxu0 0.0
    %377 = vmatprep.subr.mxu0 0.0
    %378 = vmatpush1.xpose.msra.mxu0 0.0
    %379 = vmatprep.mubr.f32.mxu0 0.0
    %380 = vmatmul.mubr.f32.gmra.mrb[0].mxu0 %v301
    %v381 = vpop.f32.mrb[0].mxu0
    %v382 = vadd.f32 %v298, %v381
    %v383 = vpop.f32.mrb[0].mxu0
    %384 = vdwg.mxu0
    %vm385 = vcmask 254976
    %386 = vst.msk [vmem:[#allocation5] sm:$0x3] %vm385, %v382
    // Predicated region
    $region34: #{tpu_custom_call.1} parent=1 // pred_check
      _
    $region35: #{tpu_custom_call.1} parent=1 // pred_check_branch
      %388 = sbr.rel (0) target = $region37
    $region36: #{tpu_custom_call.1} parent=1 // pred_region
      %s390 = ssub.s32 32, 32
      %391 = vsyncadd [#allocation4], %s390
      %s393 = sshll.u32 [#allocation5], 4
      %s394 = int_to_ptr.vmem [resolvable:$true] %s393
      %396 = dma.vmem_to_hbm [thread:$0]  %s394, 32, %s7, [#allocation4]
    $region37: #{tpu_custom_call.1} parent=1 // pred_fallthru
      _
    // Predicated region
    $region38: #{tpu_custom_call.1} parent=1 // pred_check
      _
    $region39: #{tpu_custom_call.1} parent=1 // pred_check_branch
      %398 = sbr.rel (0) target = $region41
    $region40: #{tpu_custom_call.1} parent=1 // pred_region
      %399 = dma.done [#allocation4], 32
    $region41: #{tpu_custom_call.1} parent=1 // pred_fallthru
      _
    %400 = vsyncpa [#allocation3], 1
    %401 = vsyncpa [#allocation4], 1

</llo_original>
